<compile_context>
chip_gen: v7x
topology: tpu7x:2x2x1
jax: 0.10.0
libtpu: 0.0.40
codegen_flags: <defaults>
</compile_context>

<pallas_src>
import functools
import math

import jax
import jax.numpy as jnp
from jax import lax
from jax.experimental import pallas as pl
from jax.experimental.pallas import tpu as pltpu


def _round_up(x: int, m: int) -> int:
    return ((x + m - 1) // m) * m


_RESIDENT_TABLE_BYTES = 8 * 1024 * 1024  # table <= 8 MiB -> keep it in VMEM


# ---------------------------------------------------------------------------
# Path A: embedding table resident in VMEM (small tables).
# ---------------------------------------------------------------------------
def _embed_kernel_vmem(ids_ref, emb_ref, out_ref, *, scale, block_tokens):
    """ids_ref: SMEM (n_pad,) i32; emb_ref: VMEM (vocab, d_model);
    out_ref: VMEM (block_tokens, d_model)."""
    blk = pl.program_id(0)
    base = blk * block_tokens

    def gather_row(t, carry):
        row = ids_ref[base + t]
        # Fused gather + scale + store (single pass over the row).
        out_ref[pl.ds(t, 1), :] = (
            emb_ref[pl.ds(row, 1), :] * scale).astype(out_ref.dtype)
        return carry

    # Unrolled so SMEM loads / address math / stores co-issue.
    lax.fori_loop(0, block_tokens, gather_row, None, unroll=8)


# ---------------------------------------------------------------------------
# Path B: table in HBM, chunk-pipelined per-row DMA gather straight into the
# output block (no staging buffer).
# ---------------------------------------------------------------------------
def _embed_kernel_hbm(ids_ref, emb_hbm, out_ref, sem, *,
                      scale, block_tokens, chunk_rows):
    """ids_ref: SMEM (n_pad,) i32; emb_hbm: HBM (vocab, d_model) (pl.ANY);
    out_ref: VMEM (block_tokens, d_model); sem: DMA semaphores (2,)."""
    blk = pl.program_id(0)
    base = blk * block_tokens

    # Static (Python-level) chunk schedule.
    offs = list(range(0, block_tokens, chunk_rows))
    sizes = [min(chunk_rows, block_tokens - o) for o in offs]
    n_chunks = len(offs)

    def issue_chunk(c):
        off, size = offs[c], sizes[c]

        def issue_row(t, carry):
            row = ids_ref[base + off + t]
            pltpu.make_async_copy(
                emb_hbm.at[pl.ds(row, 1), :],
                out_ref.at[pl.ds(off + t, 1), :],   # land directly in output
                sem.at[c % 2],
            ).start()
            return carry

        # Unrolled descriptor-issue loop (scalar/misc-slot bound otherwise).
        lax.fori_loop(0, size, issue_row, None, unroll=8)

    def wait_chunk(c):
        off, size = offs[c], sizes[c]
        # Single chunk-sized wait: the descriptor's byte count equals the sum
        # of the `size` per-row copies above (DMA semaphores count bytes).
        # src is only used for shape/dtype checking; .wait() never starts it.
        pltpu.make_async_copy(
            out_ref.at[pl.ds(off, size), :],
            out_ref.at[pl.ds(off, size), :],
            sem.at[c % 2],
        ).wait()

    # Intra-block software pipeline: keep the next chunk's DMAs in flight while
    # waiting on / scaling the current chunk.  All state is local to this grid
    # step, so the grid axis stays safely "parallel" (v7x megacore).
    issue_chunk(0)
    for c in range(n_chunks):
        if c + 1 < n_chunks:
            issue_chunk(c + 1)
        wait_chunk(c)
        off, size = offs[c], sizes[c]
        # Fused in-place scale (sqrt(d_model) folded into the one VMEM pass).
        out_ref[pl.ds(off, size), :] = (
            out_ref[pl.ds(off, size), :] * scale).astype(out_ref.dtype)


# ---------------------------------------------------------------------------
# Wrapper
# ---------------------------------------------------------------------------
@functools.partial(jax.jit, static_argnames=("block_tokens", "force_hbm_gather"))
def input_embeddings_forward(token_ids, embedding, *,
                             block_tokens=256, force_hbm_gather=False):
    """Returns embedding[token_ids] * sqrt(d_model) (matches the PyTorch module)."""
    vocab_size, d_model = embedding.shape
    esize = jnp.dtype(embedding.dtype).itemsize
    scale = math.sqrt(float(d_model))

    orig_shape = token_ids.shape
    ids = token_ids.reshape(-1).astype(jnp.int32)
    n_tokens = int(ids.shape[0])

    # dtype-dependent packed sublane count: 8 (f32) / 16 (bf16) / 32 (int8/fp8)
    sub = max(8, 32 // esize)

    # --- block size -------------------------------------------------------
    bt = _round_up(max(int(block_tokens), sub), sub)
    bt = min(bt, _round_up(n_tokens, sub))
    # Keep the pipelined output double-buffer modest (valid on v7x's 64 MiB).
    while bt > sub and 2 * bt * d_model * esize > 8 * 1024 * 1024:
        bt = max(sub, _round_up(bt // 2, sub))
    # Give v7x's second TensorCore work: aim for >= 2 grid blocks.
    if n_tokens >= 2 * sub:
        while bt > sub and _round_up(n_tokens, bt) // bt < 2:
            bt = max(sub, _round_up(bt // 2, sub))

    n_pad = _round_up(n_tokens, bt)
    # Pad ids with 0 (a valid row); padded rows are sliced off afterwards.
    ids_padded = jnp.pad(ids, (0, n_pad - n_tokens))
    grid = (n_pad // bt,)
    # NOTE: all ids are scalar-prefetched into SMEM; fine up to ~64K tokens.
    # TODO(synk): for very long batch*seq, deliver ids per-block or chunk the call.

    table_bytes = vocab_size * d_model * esize
    use_resident = (not force_hbm_gather) and table_bytes <= _RESIDENT_TABLE_BYTES

    if use_resident:
        kernel = functools.partial(_embed_kernel_vmem,
                                   scale=scale, block_tokens=bt)
        in_specs = [pl.BlockSpec((vocab_size, d_model), lambda i, ids: (0, 0))]
        scratch = []
    else:
        chunk_rows = min(bt, _round_up(32, sub))
        kernel = functools.partial(_embed_kernel_hbm, scale=scale,
                                   block_tokens=bt, chunk_rows=chunk_rows)
        in_specs = [pl.BlockSpec(memory_space=pl.ANY)]   # raw HBM table
        scratch = [pltpu.SemaphoreType.DMA((2,))]        # chunk double-buffer sems

    out_buf_bytes = 2 * bt * d_model * esize
    vmem_need = (2 * table_bytes + out_buf_bytes) if use_resident else out_buf_bytes
    vmem_limit = int(min(max(vmem_need + (4 << 20), 16 << 20), 48 << 20))

    cost = pl.CostEstimate(
        flops=int(n_pad * d_model),                         # one multiply / elem
        transcendentals=0,
        bytes_accessed=int(2 * n_pad * d_model * esize + n_pad * 4 + table_bytes),
    )

    out_padded = pl.pallas_call(
        kernel,
        out_shape=jax.ShapeDtypeStruct((n_pad, d_model), embedding.dtype),
        grid_spec=pltpu.PrefetchScalarGridSpec(
            num_scalar_prefetch=1,                          # ids -> SMEM
            grid=grid,
            in_specs=in_specs,
            out_specs=pl.BlockSpec((bt, d_model), lambda i, ids: (i, 0)),
            scratch_shapes=scratch,
        ),
        compiler_params=pltpu.CompilerParams(
            dimension_semantics=("parallel",),              # v7x: shard blocks on 2 TCs
            vmem_limit_bytes=vmem_limit,
        ),
        cost_estimate=cost,
    )(ids_padded, embedding)

    out = out_padded[:n_tokens]
    return out.reshape(*orig_shape, d_model)


def input_embeddings_reference(token_ids, embedding):
    """Pure-JAX reference mirroring the PyTorch forward exactly."""
    d_model = embedding.shape[1]
    return jnp.take(embedding, token_ids, axis=0) * math.sqrt(float(d_model))


if __name__ == "__main__":
    key = jax.random.PRNGKey(0)
    k_emb, k_ids = jax.random.split(key)

    B, S = 2, 8                      # batch, seq
    vocab_size, d_model = 512, 128   # d_model multiple of 128 -> lane-dense stores

    embedding = jax.random.normal(k_emb, (vocab_size, d_model), dtype=jnp.float32)
    token_ids = jax.random.randint(k_ids, (B, S), 0, vocab_size, dtype=jnp.int32)

    ref = input_embeddings_reference(token_ids, embedding)

    # Path A: small table -> VMEM-resident gather (the config used here).
    out_a = jax.block_until_ready(input_embeddings_forward(token_ids, embedding))
    assert out_a.shape == (B, S, d_model)
    assert jnp.allclose(out_a, ref, atol=1e-6, rtol=1e-6), (
        float(jnp.max(jnp.abs(out_a - ref))))

    # Path B: force the HBM per-row DMA gather path (large-vocab code path).
    out_b = jax.block_until_ready(
        input_embeddings_forward(token_ids, embedding, force_hbm_gather=True))
    assert jnp.allclose(out_b, ref, atol=1e-6, rtol=1e-6), (
        float(jnp.max(jnp.abs(out_b - ref))))

    print("KERNEL_OK")
</pallas_src>

<mosaic_0001>
module attributes {stable_mosaic.version = 11 : i64} {
  func.func @_embed_kernel_vmem(%arg0: i32, %arg1: memref<16xi32, #tpu.memory_space<smem>>, %arg2: memref<512x128xf32, #tpu.memory_space<vmem>>, %arg3: memref<8x128xf32, #tpu.memory_space<vmem>>) attributes {dimension_semantics = [#tpu.dimension_semantics<parallel>], iteration_bounds = array<i64: 2>, scalar_prefetch = 1 : i64, scratch_operands = 0 : i64, tpu.core_type = #tpu.core_type<tc>, window_params = [{pipeline_mode = #tpu.pipeline_mode<synchronous>, transform_indices = @transform_0, window_bounds = array<i64: 512, 128>}, {transform_indices = @transform_1, window_bounds = array<i64: 8, 128>}]} {
    %c8_i32 = arith.constant 8 : i32
    %0 = arith.muli %arg0, %c8_i32 : i32
    %c0_i32 = arith.constant 0 : i32
    %1 = arith.addi %0, %c0_i32 : i32
    %2 = arith.index_cast %1 : i32 to index
    %3 = memref.load %arg1[%2] : memref<16xi32, #tpu.memory_space<smem>>
    %4 = arith.index_cast %3 : i32 to index
    %c0 = arith.constant 0 : index
    %5 = vector.load %arg2[%4, %c0] : memref<512x128xf32, #tpu.memory_space<vmem>>, vector<1x128xf32>
    %cst = arith.constant 11.3137083 : f32
    %6 = vector.broadcast %cst : f32 to vector<1x128xf32>
    %7 = arith.mulf %5, %6 : vector<1x128xf32>
    %8 = arith.index_cast %c0_i32 : i32 to index
    %c0_0 = arith.constant 0 : index
    %9 = vector.load %arg3[%8, %c0_0] : memref<8x128xf32, #tpu.memory_space<vmem>>, vector<1x128xf32>
    tpu.vector_store %arg3[%8, %c0_0], %7 {strides = array<i32>} : memref<8x128xf32, #tpu.memory_space<vmem>>, vector<1x128xf32>,
    %c1_i32 = arith.constant 1 : i32
    %10 = arith.addi %0, %c1_i32 : i32
    %11 = arith.index_cast %10 : i32 to index
    %12 = memref.load %arg1[%11] : memref<16xi32, #tpu.memory_space<smem>>
    %13 = arith.index_cast %12 : i32 to index
    %c0_1 = arith.constant 0 : index
    %14 = vector.load %arg2[%13, %c0_1] : memref<512x128xf32, #tpu.memory_space<vmem>>, vector<1x128xf32>
    %cst_2 = arith.constant 11.3137083 : f32
    %15 = vector.broadcast %cst_2 : f32 to vector<1x128xf32>
    %16 = arith.mulf %14, %15 : vector<1x128xf32>
    %17 = arith.index_cast %c1_i32 : i32 to index
    %c0_3 = arith.constant 0 : index
    %18 = vector.load %arg3[%17, %c0_3] : memref<8x128xf32, #tpu.memory_space<vmem>>, vector<1x128xf32>
    tpu.vector_store %arg3[%17, %c0_3], %16 {strides = array<i32>} : memref<8x128xf32, #tpu.memory_space<vmem>>, vector<1x128xf32>,
    %c2_i32 = arith.constant 2 : i32
    %19 = arith.addi %0, %c2_i32 : i32
    %20 = arith.index_cast %19 : i32 to index
    %21 = memref.load %arg1[%20] : memref<16xi32, #tpu.memory_space<smem>>
    %22 = arith.index_cast %21 : i32 to index
    %c0_4 = arith.constant 0 : index
    %23 = vector.load %arg2[%22, %c0_4] : memref<512x128xf32, #tpu.memory_space<vmem>>, vector<1x128xf32>
    %cst_5 = arith.constant 11.3137083 : f32
    %24 = vector.broadcast %cst_5 : f32 to vector<1x128xf32>
    %25 = arith.mulf %23, %24 : vector<1x128xf32>
    %26 = arith.index_cast %c2_i32 : i32 to index
    %c0_6 = arith.constant 0 : index
    %27 = vector.load %arg3[%26, %c0_6] : memref<8x128xf32, #tpu.memory_space<vmem>>, vector<1x128xf32>
    tpu.vector_store %arg3[%26, %c0_6], %25 {strides = array<i32>} : memref<8x128xf32, #tpu.memory_space<vmem>>, vector<1x128xf32>,
    %c3_i32 = arith.constant 3 : i32
    %28 = arith.addi %0, %c3_i32 : i32
    %29 = arith.index_cast %28 : i32 to index
    %30 = memref.load %arg1[%29] : memref<16xi32, #tpu.memory_space<smem>>
    %31 = arith.index_cast %30 : i32 to index
    %c0_7 = arith.constant 0 : index
    %32 = vector.load %arg2[%31, %c0_7] : memref<512x128xf32, #tpu.memory_space<vmem>>, vector<1x128xf32>
    %cst_8 = arith.constant 11.3137083 : f32
    %33 = vector.broadcast %cst_8 : f32 to vector<1x128xf32>
    %34 = arith.mulf %32, %33 : vector<1x128xf32>
    %35 = arith.index_cast %c3_i32 : i32 to index
    %c0_9 = arith.constant 0 : index
    %36 = vector.load %arg3[%35, %c0_9] : memref<8x128xf32, #tpu.memory_space<vmem>>, vector<1x128xf32>
    tpu.vector_store %arg3[%35, %c0_9], %34 {strides = array<i32>} : memref<8x128xf32, #tpu.memory_space<vmem>>, vector<1x128xf32>,
    %c4_i32 = arith.constant 4 : i32
    %37 = arith.addi %0, %c4_i32 : i32
    %38 = arith.index_cast %37 : i32 to index
    %39 = memref.load %arg1[%38] : memref<16xi32, #tpu.memory_space<smem>>
    %40 = arith.index_cast %39 : i32 to index
    %c0_10 = arith.constant 0 : index
    %41 = vector.load %arg2[%40, %c0_10] : memref<512x128xf32, #tpu.memory_space<vmem>>, vector<1x128xf32>
    %cst_11 = arith.constant 11.3137083 : f32
    %42 = vector.broadcast %cst_11 : f32 to vector<1x128xf32>
    %43 = arith.mulf %41, %42 : vector<1x128xf32>
    %44 = arith.index_cast %c4_i32 : i32 to index
    %c0_12 = arith.constant 0 : index
    %45 = vector.load %arg3[%44, %c0_12] : memref<8x128xf32, #tpu.memory_space<vmem>>, vector<1x128xf32>
    tpu.vector_store %arg3[%44, %c0_12], %43 {strides = array<i32>} : memref<8x128xf32, #tpu.memory_space<vmem>>, vector<1x128xf32>,
    %c5_i32 = arith.constant 5 : i32
    %46 = arith.addi %0, %c5_i32 : i32
    %47 = arith.index_cast %46 : i32 to index
    %48 = memref.load %arg1[%47] : memref<16xi32, #tpu.memory_space<smem>>
    %49 = arith.index_cast %48 : i32 to index
    %c0_13 = arith.constant 0 : index
    %50 = vector.load %arg2[%49, %c0_13] : memref<512x128xf32, #tpu.memory_space<vmem>>, vector<1x128xf32>
    %cst_14 = arith.constant 11.3137083 : f32
    %51 = vector.broadcast %cst_14 : f32 to vector<1x128xf32>
    %52 = arith.mulf %50, %51 : vector<1x128xf32>
    %53 = arith.index_cast %c5_i32 : i32 to index
    %c0_15 = arith.constant 0 : index
    %54 = vector.load %arg3[%53, %c0_15] : memref<8x128xf32, #tpu.memory_space<vmem>>, vector<1x128xf32>
    tpu.vector_store %arg3[%53, %c0_15], %52 {strides = array<i32>} : memref<8x128xf32, #tpu.memory_space<vmem>>, vector<1x128xf32>,
    %c6_i32 = arith.constant 6 : i32
    %55 = arith.addi %0, %c6_i32 : i32
    %56 = arith.index_cast %55 : i32 to index
    %57 = memref.load %arg1[%56] : memref<16xi32, #tpu.memory_space<smem>>
    %58 = arith.index_cast %57 : i32 to index
    %c0_16 = arith.constant 0 : index
    %59 = vector.load %arg2[%58, %c0_16] : memref<512x128xf32, #tpu.memory_space<vmem>>, vector<1x128xf32>
    %cst_17 = arith.constant 11.3137083 : f32
    %60 = vector.broadcast %cst_17 : f32 to vector<1x128xf32>
    %61 = arith.mulf %59, %60 : vector<1x128xf32>
    %62 = arith.index_cast %c6_i32 : i32 to index
    %c0_18 = arith.constant 0 : index
    %63 = vector.load %arg3[%62, %c0_18] : memref<8x128xf32, #tpu.memory_space<vmem>>, vector<1x128xf32>
    tpu.vector_store %arg3[%62, %c0_18], %61 {strides = array<i32>} : memref<8x128xf32, #tpu.memory_space<vmem>>, vector<1x128xf32>,
    %c7_i32 = arith.constant 7 : i32
    %64 = arith.addi %0, %c7_i32 : i32
    %65 = arith.index_cast %64 : i32 to index
    %66 = memref.load %arg1[%65] : memref<16xi32, #tpu.memory_space<smem>>
    %67 = arith.index_cast %66 : i32 to index
    %c0_19 = arith.constant 0 : index
    %68 = vector.load %arg2[%67, %c0_19] : memref<512x128xf32, #tpu.memory_space<vmem>>, vector<1x128xf32>
    %cst_20 = arith.constant 11.3137083 : f32
    %69 = vector.broadcast %cst_20 : f32 to vector<1x128xf32>
    %70 = arith.mulf %68, %69 : vector<1x128xf32>
    %71 = arith.index_cast %c7_i32 : i32 to index
    %c0_21 = arith.constant 0 : index
    %72 = vector.load %arg3[%71, %c0_21] : memref<8x128xf32, #tpu.memory_space<vmem>>, vector<1x128xf32>
    tpu.vector_store %arg3[%71, %c0_21], %70 {strides = array<i32>} : memref<8x128xf32, #tpu.memory_space<vmem>>, vector<1x128xf32>,
    %c8_i32_22 = arith.constant 8 : i32
    return
  }
  func.func @transform_0(%arg0: i32, %arg1: memref<16xi32, #tpu.memory_space<smem>>) -> (i32, i32) {
    %c0_i32 = arith.constant 0 : i32
    %c0_i32_0 = arith.constant 0 : i32
    %c0_i32_1 = arith.constant 0 : i32
    return %c0_i32, %c0_i32_0 : i32, i32
  }
  func.func @transform_1(%arg0: i32, %arg1: memref<16xi32, #tpu.memory_space<smem>>) -> (i32, i32) {
    %c0_i32 = arith.constant 0 : i32
    %c0_i32_0 = arith.constant 0 : i32
    return %arg0, %c0_i32 : i32, i32
  }
}

</mosaic_0001>

<llo_original>
// kernel: input_embeddings_forward.1
$region0: #{input_embeddings_forward.1}
  #allocation0 [shape = 'u32[]', space=smem, size = 0x4, offset = 0x4, fixed_abs, tag = 'smem constant byte address 0x4 - core index']
  #allocation1 [shape = 'u32[144,128]{1,0:T(1,128)}', space=vmem, size = 0x12000, scoped, tag = 'internal scratch']
  #allocation2 [shape = 's32[1]{0}', space=sflag, size = 0x4, scoped, tag = 'scoped memory for input_embeddings_forward.1']
  #allocation3 [shape = 'u8[512]{0}', space=smem, size = 0x200, scoped, tag = 'prefetched SMEM operand 0']
  %s0 = inlined_call_operand.vmem [shape: s32[16], index: 0, kind: input, shape index: {}]
  %s1 = inlined_call_operand.hbm [shape: f32[512,128], index: 1, kind: input, shape index: {}]
  %s2 = inlined_call_operand.hbm [shape: f32[16,128], index: 2, kind: output, shape index: {}]
  %s3 = sld [smem:[#allocation0]]
  $region41: #{input_embeddings_forward.1} parent=0
    _
  %s5 = ssub.s32 1, %s3
  %s6 = scalar_select 0, %s5, %s3
  %s7 = sshll.u32 %s0, 4
  %s8 = int_to_ptr.vmem [resolvable:$true] %s7
  %10 = dma.vmem_to_smem %s8, 16, [#allocation3], [#allocation2]
  %11 = dma.done [#allocation2], 16
  %12 = sfence
  $region1: #{input_embeddings_forward.1} parent=0
    #allocation4 [shape = 'u8[262144]{0}', space=vmem, size = 0x40000, scoped, tag = 'input window, operand 1, single buffered']
    #allocation5 [shape = 's32[2]{0}', space=sflag, size = 0x8, scoped, tag = 'scoped memory for input_embeddings_forward.1']
    #allocation6 [shape = 's32[2]{0}', space=sflag, size = 0x8, scoped, tag = 'scoped memory for input_embeddings_forward.1']
    #allocation7 [shape = 'u8[8192]{0}', space=vmem, size = 0x2000, scoped, tag = 'output window, operand 0']
    %13 = vsyncpa [#allocation5], 0
    %14 = vsyncpa [#allocation6], 0
    %s15 = scalar_lea.sflag [#allocation6], 1
    %16 = vsyncpa %s15, 0
    loop: start=0, step=1, limit=4
    $region2: #{input_embeddings_forward.1} parent=1 // loop_pre_header
      _
    $region3: #{input_embeddings_forward.1} parent=1 // loop_header
      %s18 = sphi 0, %s22
      %p19 = scmp.ge.s32.totalorder %s18, 4
      %s26 = sphi 0, %s26
      %s28 = sphi 0, %s26
      %s29 = sphi 0, %s28
      %s43 = sphi 0, %s29
      %s49 = sphi 0, %s51
      %s52 = sphi 0, %s49
      %s53 = sphi 0, %s52
      %s69 = sphi 0, %s53
    $region4: #{input_embeddings_forward.1} parent=1 // loop_header_branch
      %21 = sbr.rel (%p19) target = $region8
    $region5: #{input_embeddings_forward.1} parent=1 // loop_body
      %s23 = ssub.s32 %s18, 1
      %s24 = ssub.s32 %s18, 2
      %s25 = sadd.s32 %s18, 1
      %s27 = sadd.s32 %s26, 1
      %p30 = scmp.eq.s32.totalorder %s18, 1
      %p31 = scmp.ne.s32.totalorder %s26, %s28
      %p32 = scmp.eq.s32.totalorder %s18, 0
      %p33 = por %p31, %p32
      %p34 = scmp.ne.s32.totalorder %s26, %s28
      %p35 = scmp.eq.s32.totalorder %s23, 1
      %p36 = por %p34, %p35
      %p37 = scmp.ne.s32.totalorder %s28, %s29
      %p38 = scmp.eq.s32.totalorder %s23, 0
      %p39 = por %p37, %p38
      %p40 = scmp.ne.s32.totalorder %s28, %s29
      %p41 = scmp.eq.s32.totalorder %s24, 1
      %p42 = por %p40, %p41
      %p44 = scmp.ne.s32.totalorder %s29, %s43
      %p45 = scmp.eq.s32.totalorder %s24, 0
      %p46 = por %p44, %p45
      %s47 = ssub.s32 %s18, %s25
      %p48 = scmp.eq.s32.totalorder %s47, 0
      %s50 = sadd.s32 %s49, 1
      %s51 = scalar_select %p48, %s49, %s50
      %p54 = pneg %p48
      %p55 = scmp.eq.s32.totalorder %s18, 1
      %p56 = por %p54, %p55
      %p57 = scmp.ne.s32.totalorder %s49, %s52
      %p58 = scmp.eq.s32.totalorder %s18, 0
      %p59 = por %p57, %p58
      %p60 = scmp.ne.s32.totalorder %s49, %s52
      %p61 = scmp.eq.s32.totalorder %s23, 1
      %p62 = por %p60, %p61
      %p63 = scmp.ne.s32.totalorder %s52, %s53
      %p64 = scmp.eq.s32.totalorder %s23, 0
      %p65 = por %p63, %p64
      %p66 = scmp.ne.s32.totalorder %s52, %s53
      %p67 = scmp.eq.s32.totalorder %s24, 1
      %p68 = por %p66, %p67
      %p70 = scmp.ne.s32.totalorder %s53, %s69
      %p71 = scmp.eq.s32.totalorder %s24, 0
      %p72 = por %p70, %p71
      %p73 = scmp.le.s32.totalorder 1, %s18
      %p74 = scmp.lt.s32.totalorder %s18, 3
      %p75 = pnand %p73, %p74
      %p76 = pneg %p75
      // Predicated region
      $region9: #{input_embeddings_forward.1} parent=5 // pred_check
        _
      $region10: #{input_embeddings_forward.1} parent=5 // pred_check_branch
        %78 = sbr.rel (%p75) target = $region12
      $region11: #{input_embeddings_forward.1} parent=5 // pred_region
        %s79 = ssub.s32 %s18, 1
        // Predicated region
        $region13: #{input_embeddings_forward.1} parent=11 // pred_check
          %p80 = pneg %p39
        $region14: #{input_embeddings_forward.1} parent=11 // pred_check_branch
          %82 = sbr.rel (%p80) target = $region16
        $region15: #{input_embeddings_forward.1} parent=11 // pred_region
          %s84 = ssub.s32 8192, 8192
          %85 = vsyncadd [#allocation5], %s84
          %s86 = sshll.u32 [#allocation4], 4
          %s87 = int_to_ptr.vmem [resolvable:$true] %s86
          %92 = dma.hbm_to_vmem [thread:$0]  %s1, 8192, %s87, [#allocation5], 128, 128, 8
        $region16: #{input_embeddings_forward.1} parent=11 // pred_fallthru
          _
      $region12: #{input_embeddings_forward.1} parent=5 // pred_fallthru
        _
      %p93 = scmp.lt.s32.totalorder %s18, 2
      // Predicated region
      $region17: #{input_embeddings_forward.1} parent=5 // pred_check
        %p94 = pneg %p93
      $region18: #{input_embeddings_forward.1} parent=5 // pred_check_branch
        %96 = sbr.rel (%p94) target = $region20
      $region19: #{input_embeddings_forward.1} parent=5 // pred_region
        _
      $region20: #{input_embeddings_forward.1} parent=5 // pred_fallthru
        _
      %p97 = scmp.le.s32.totalorder 1, %s18
      %p98 = scmp.lt.s32.totalorder %s18, 3
      %p99 = pnand %p97, %p98
      %p100 = pneg %p99
      // Predicated region
      $region21: #{input_embeddings_forward.1} parent=5 // pred_check
        _
      $region22: #{input_embeddings_forward.1} parent=5 // pred_check_branch
        %102 = sbr.rel (%p99) target = $region24
      $region23: #{input_embeddings_forward.1} parent=5 // pred_region
        %s103 = ssub.s32 %s18, 1
        // Predicated region
        $region25: #{input_embeddings_forward.1} parent=23 // pred_check
          %p104 = pneg %p39
        $region26: #{input_embeddings_forward.1} parent=23 // pred_check_branch
          %106 = sbr.rel (%p104) target = $region28
        $region27: #{input_embeddings_forward.1} parent=23 // pred_region
          %107 = dma.done [#allocation5], 8192
        $region28: #{input_embeddings_forward.1} parent=23 // pred_fallthru
          _
        %p108 = pneg %p39
        %p109 = pneg %p36
        %p110 = pneg %p65
        %p111 = pneg %p62
        %s112 = sand.u32 %s52, 1
        %s113 = scalar_lea.sflag [#allocation6], %s112
        %s114 = sand.u32 %s52, 1
        %s115 = smul.addr %s114, 8
        %s116 = scalar_lea.vmem [#allocation7], %s115
        %s117 = smul.u32 %s23, 8
        %s118 = sld [smem:[#allocation3 + %s117]]
        %s119 = scalar_lea.vmem [#allocation4], %s118
        %v120 = vld [vmem:[%s119] sm:$0x1]
        %v121 = vmul.f32 %v120, 11.313708
        %122 = vst [vmem:[%s116] sm:$0x1] %v121
        %s123 = sadd.s32 %s117, 1
        %s124 = sld [smem:[#allocation3 + %s123]]
        %s125 = scalar_lea.vmem [#allocation4], %s124
        %v126 = vld [vmem:[%s125] sm:$0x1]
        %v127 = vmul.f32 %v126, 11.313708
        %128 = vst [vmem:[%s116 + $0x1] sm:$0x1] %v127
        %s129 = sadd.s32 %s117, 2
        %s130 = sld [smem:[#allocation3 + %s129]]
        %s131 = scalar_lea.vmem [#allocation4], %s130
        %v132 = vld [vmem:[%s131] sm:$0x1]
        %v133 = vmul.f32 %v132, 11.313708
        %134 = vst [vmem:[%s116 + $0x2] sm:$0x1] %v133
        %s135 = sadd.s32 %s117, 3
        %s136 = sld [smem:[#allocation3 + %s135]]
        %s137 = scalar_lea.vmem [#allocation4], %s136
        %v138 = vld [vmem:[%s137] sm:$0x1]
        %v139 = vmul.f32 %v138, 11.313708
        %140 = vst [vmem:[%s116 + $0x3] sm:$0x1] %v139
        %s141 = sadd.s32 %s117, 4
        %s142 = sld [smem:[#allocation3 + %s141]]
        %s143 = scalar_lea.vmem [#allocation4], %s142
        %v144 = vld [vmem:[%s143] sm:$0x1]
        %v145 = vmul.f32 %v144, 11.313708
        %146 = vst [vmem:[%s116 + $0x4] sm:$0x1] %v145
        %s147 = sadd.s32 %s117, 5
        %s148 = sld [smem:[#allocation3 + %s147]]
        %s149 = scalar_lea.vmem [#allocation4], %s148
        %v150 = vld [vmem:[%s149] sm:$0x1]
        %v151 = vmul.f32 %v150, 11.313708
        %152 = vst [vmem:[%s116 + $0x5] sm:$0x1] %v151
        %s153 = sadd.s32 %s117, 6
        %s154 = sld [smem:[#allocation3 + %s153]]
        %s155 = scalar_lea.vmem [#allocation4], %s154
        %v156 = vld [vmem:[%s155] sm:$0x1]
        %v157 = vmul.f32 %v156, 11.313708
        %158 = vst [vmem:[%s116 + $0x6] sm:$0x1] %v157
        %s159 = sadd.s32 %s117, 7
        %s160 = sld [smem:[#allocation3 + %s159]]
        %s161 = scalar_lea.vmem [#allocation4], %s160
        %v162 = vld [vmem:[%s161] sm:$0x1]
        %v163 = vmul.f32 %v162, 11.313708
        %164 = vst [vmem:[%s116 + $0x7] sm:$0x1] %v163
        %s165 = sand.u32 %s52, 1
        %s166 = scalar_lea.sflag [#allocation6], %s165
        %s167 = sand.u32 %s52, 1
        %s168 = smul.addr %s167, 8
        %s169 = scalar_lea.vmem [#allocation7], %s168
        // Predicated region
        $region29: #{input_embeddings_forward.1} parent=23 // pred_check
          %p170 = pneg %p62
        $region30: #{input_embeddings_forward.1} parent=23 // pred_check_branch
          %172 = sbr.rel (%p170) target = $region32
        $region31: #{input_embeddings_forward.1} parent=23 // pred_region
          %s174 = ssub.s32 128, 128
          %175 = vsyncadd %s166, %s174
          %s176 = smul.addr %s23, 128
          %s177 = scalar_lea.hbm %s2, %s176
          %s179 = sshll.u32 %s169, 4
          %s180 = int_to_ptr.vmem [resolvable:$true] %s179
          %182 = dma.vmem_to_hbm [thread:$0]  %s180, 128, %s177, %s166
        $region32: #{input_embeddings_forward.1} parent=23 // pred_fallthru
          _
      $region24: #{input_embeddings_forward.1} parent=5 // pred_fallthru
        _
      %p183 = scmp.le.s32.totalorder 2, %s18
      // Predicated region
      $region33: #{input_embeddings_forward.1} parent=5 // pred_check
        %p184 = pneg %p183
      $region34: #{input_embeddings_forward.1} parent=5 // pred_check_branch
        %186 = sbr.rel (%p184) target = $region36
      $region35: #{input_embeddings_forward.1} parent=5 // pred_region
        %s187 = ssub.s32 %s18, 2
        // Predicated region
        $region37: #{input_embeddings_forward.1} parent=35 // pred_check
          %p188 = pneg %p68
        $region38: #{input_embeddings_forward.1} parent=35 // pred_check_branch
          %190 = sbr.rel (%p188) target = $region40
        $region39: #{input_embeddings_forward.1} parent=35 // pred_region
          %s191 = sand.u32 %s53, 1
          %s192 = scalar_lea.sflag [#allocation6], %s191
          %s193 = sand.u32 %s53, 1
          %s194 = smul.addr %s193, 8
          %s195 = scalar_lea.vmem [#allocation7], %s194
          %196 = dma.done %s192, 128
        $region40: #{input_embeddings_forward.1} parent=35 // pred_fallthru
          _
      $region36: #{input_embeddings_forward.1} parent=5 // pred_fallthru
        _
    $region6: #{input_embeddings_forward.1} parent=1 // loop_footer
      %s22 = sadd.s32 1, %s18
    $region7: #{input_embeddings_forward.1} parent=1 // loop_footer_branch
      %17 = sbr.rel target = $region3
    $region8: #{input_embeddings_forward.1} parent=1 // loop_exit
      _
    %197 = vsyncpa [#allocation5], 1
    %s198 = scalar_lea.sflag [#allocation5], 1
    %199 = vsyncpa %s198, 1
    %200 = vsyncpa [#allocation6], 1
    %s201 = scalar_lea.sflag [#allocation6], 1
    %202 = vsyncpa %s201, 1

</llo_original>
